<compile_context>
chip_gen: v5e
topology: v5e:2x2
jax: 0.10.0
libtpu: 0.0.40
codegen_flags: <defaults>
</compile_context>

<pallas_src>
import functools

import jax
import jax.numpy as jnp
from jax.experimental import pallas as pl
from jax.experimental.pallas import tpu as pltpu

BN_EPS = 1e-5


def _round_up(a: int, b: int) -> int:
    return ((a + b - 1) // b) * b


def _conv_stats_kernel(xa_ref, xb_ref, w_ref, mask_ref, y_ref, psum_ref, psq_ref,
                       *, offsets, tile_m):
    """Phase 1: fused im2col + conv matmul + per-tile BN partial sums.

    xa_ref, xb_ref : (Cin, TILE_M)  adjacent lane tiles of the flattened padded input
    w_ref          : (Cout, K*K*Cin) weights, tap-major columns
    mask_ref       : (1, TILE_M)    1.0 where the flat position is a valid conv output
    y_ref          : (Cout, TILE_M) conv output tile (lane-dense)
    psum_ref/psq_ref: (1, Cout, 1)  per-tile partial sum / sum of squares
    """
    # Two adjacent tiles cover every shifted window (max tap offset <= TILE_M).
    xcat = jnp.concatenate([xa_ref[...], xb_ref[...]], axis=1)          # (Cin, 2*TILE_M)
    # Fused im2col: K*K statically shifted slices stacked along sublanes -> (Cin*K*K, TILE_M)
    xcol = jnp.concatenate([xcat[:, off:off + tile_m] for off in offsets], axis=0)
    # Single MXU matmul, f32 accumulation; output is lane-dense (Cout, TILE_M).
    y = jnp.dot(w_ref[...], xcol, preferred_element_type=jnp.float32)
    y_ref[...] = y

    # BN training statistics (partial, this tile): mask out invalid (wide / tail) lanes.
    ym = y * mask_ref[...]
    psum_ref[0] = jnp.sum(ym, axis=1, keepdims=True)                    # (Cout, 1)
    psq_ref[0] = jnp.sum(ym * y, axis=1, keepdims=True)                 # (Cout, 1)


def _bn_apply_kernel(y_ref, scale_ref, shift_ref, o_ref):
    """Phase 2: per-channel affine normalize, y*scale + shift (scale/shift fold mean/var/gamma/beta)."""
    o_ref[...] = y_ref[...] * scale_ref[...] + shift_ref[...]


@functools.partial(jax.jit, static_argnames=("dilation", "padding", "tile_m", "compute_dtype"))
def conv2d_bn_forward(x, weight, bias, gamma, beta, *, dilation=1, padding=0,
                      tile_m=256, compute_dtype=jnp.float32):
    """x: (N, Cin, H, W); weight: (Cout, Cin, K, K); bias/gamma/beta: (Cout,).

    `bias` is accepted for API parity but not used: under training-mode BatchNorm the conv
    bias is exactly cancelled by the mean subtraction (see perf review).
    """
    del bias
    N, Cin, H, W = x.shape
    Cout, _, K, _ = weight.shape
    d, p = dilation, padding

    Hp, Wp = H + 2 * p, W + 2 * p
    Hout, Wout = Hp - d * (K - 1), Wp - d * (K - 1)

    # Conv is evaluated at EVERY padded spatial position so each tap becomes a static 1-D
    # shift along the flattened lane axis: s_in = s_out + kh*d*Wp + kw*d. Positions with
    # h >= Hout or w >= Wout are garbage; they are masked out of the BN statistics and
    # sliced away at the end (small Hp*Wp/(Hout*Wout) overcompute in exchange for a fully
    # fused im2col with only lane-aligned DMAs).
    offsets = tuple(kh * d * Wp + kw * d for kh in range(K) for kw in range(K))
    max_off = offsets[-1]
    tile_m = _round_up(max(tile_m, max_off), 128)   # 2 adjacent tiles must cover every shift

    Mw = N * Hp * Wp
    num_tiles = -(-Mw // tile_m)
    mw_pad = num_tiles * tile_m

    # ---- glue: index plumbing only (1x data, no K*K expansion) ----
    xp = jnp.pad(x, ((0, 0), (0, 0), (p, p), (p, p)))
    xflat = jnp.transpose(xp, (1, 0, 2, 3)).reshape(Cin, Mw)
    xflat = jnp.pad(xflat, ((0, 0), (0, mw_pad + tile_m - Mw))).astype(compute_dtype)
    # weight columns tap-major to match in-kernel xcol stacking: col = (kh*K + kw)*Cin + ci
    wmat = jnp.transpose(weight, (0, 2, 3, 1)).reshape(Cout, K * K * Cin).astype(compute_dtype)
    # validity mask over the wide flat axis
    s = jnp.arange(mw_pad, dtype=jnp.int32)
    sl = s % (Hp * Wp)
    valid = (s < Mw) & ((sl // Wp) < Hout) & ((sl % Wp) < Wout)
    mask = valid.astype(jnp.float32)[None, :]                           # (1, mw_pad)

    kdim = K * K * Cin
    cparams = pltpu.CompilerParams(dimension_semantics=("parallel",),
                                   vmem_limit_bytes=32 * 1024 * 1024)

    kernel1 = functools.partial(_conv_stats_kernel, offsets=offsets, tile_m=tile_m)
    y_wide, psum, psq = pl.pallas_call(
        kernel1,
        out_shape=(
            jax.ShapeDtypeStruct((Cout, mw_pad), jnp.float32),
            jax.ShapeDtypeStruct((num_tiles, Cout, 1), jnp.float32),
            jax.ShapeDtypeStruct((num_tiles, Cout, 1), jnp.float32),
        ),
        grid=(num_tiles,),
        in_specs=[
            pl.BlockSpec((Cin, tile_m), lambda m: (0, m)),       # x tile m
            pl.BlockSpec((Cin, tile_m), lambda m: (0, m + 1)),   # x tile m+1 (covers tap shifts)
            pl.BlockSpec((Cout, kdim), lambda m: (0, 0)),        # weights (constant block)
            pl.BlockSpec((1, tile_m), lambda m: (0, m)),         # validity mask
        ],
        out_specs=(
            pl.BlockSpec((Cout, tile_m), lambda m: (0, m)),      # lane-dense conv output
            pl.BlockSpec((1, Cout, 1), lambda m: (m, 0, 0)),     # per-tile sum
            pl.BlockSpec((1, Cout, 1), lambda m: (m, 0, 0)),     # per-tile sum of squares
        ),
        compiler_params=cparams,
    )(xflat, xflat, wmat, mask)

    # Finish BN statistics on tiny (Cout,) vectors; stats cover the FULL M (all tiles).
    # One-pass sumsq - mean^2 in f32 is fine for this regime (|mean| ~ std); switch to a
    # centered two-pass accumulation if |mean| >> std.
    # TODO(synk): BatchNorm running_mean/running_var buffer updates (module state side
    # effect in training mode) are not modeled; only the forward output is computed.
    count = jnp.float32(N * Hout * Wout)
    ch_sum = jnp.sum(psum[:, :, 0], axis=0)
    ch_sq = jnp.sum(psq[:, :, 0], axis=0)
    mean = ch_sum / count
    var = jnp.maximum(ch_sq / count - mean * mean, 0.0)                 # biased (training BN)
    inv_std = jax.lax.rsqrt(var + BN_EPS)
    g = gamma.astype(jnp.float32) * inv_std
    scale = g.reshape(Cout, 1)
    shift = (beta.astype(jnp.float32) - mean * g).reshape(Cout, 1)

    y_norm = pl.pallas_call(
        _bn_apply_kernel,
        out_shape=jax.ShapeDtypeStruct((Cout, mw_pad), jnp.float32),
        grid=(num_tiles,),
        in_specs=[
            pl.BlockSpec((Cout, tile_m), lambda m: (0, m)),
            pl.BlockSpec((Cout, 1), lambda m: (0, 0)),
            pl.BlockSpec((Cout, 1), lambda m: (0, 0)),
        ],
        out_specs=pl.BlockSpec((Cout, tile_m), lambda m: (0, m)),
        compiler_params=cparams,
    )(y_wide, scale, shift)

    # Back to NCHW, dropping the invalid wide positions (output-sized glue only).
    out = y_norm[:, :Mw].reshape(Cout, N, Hp, Wp)[:, :, :Hout, :Wout]
    return jnp.transpose(out, (1, 0, 2, 3))


def _reference(x, weight, bias, gamma, beta, *, dilation, padding):
    p, d = padding, dilation
    y = jax.lax.conv_general_dilated(
        x, weight, window_strides=(1, 1), padding=((p, p), (p, p)),
        rhs_dilation=(d, d), dimension_numbers=("NCHW", "OIHW", "NCHW"),
    ) + bias[None, :, None, None]
    mean = y.mean(axis=(0, 2, 3), keepdims=True)
    var = y.var(axis=(0, 2, 3), keepdims=True)  # biased, matches training-mode BN normalization
    return (y - mean) / jnp.sqrt(var + BN_EPS) * gamma[None, :, None, None] \
        + beta[None, :, None, None]


if __name__ == "__main__":
    # Module config: Conv2dBN(in_channels=4, out_channels=8, kernel_size=3, dilation=2, padding=2)
    N, Cin, H, W = 2, 4, 16, 16
    Cout, K = 8, 3
    dilation, padding = 2, 2

    key = jax.random.PRNGKey(0)
    k_x, k_w, k_b, k_g, k_bt = jax.random.split(key, 5)
    x = jax.random.normal(k_x, (N, Cin, H, W), dtype=jnp.float32)
    weight = jax.random.normal(k_w, (Cout, Cin, K, K), dtype=jnp.float32) * 0.1
    bias = jax.random.normal(k_b, (Cout,), dtype=jnp.float32) * 0.1
    gamma = 1.0 + 0.1 * jax.random.normal(k_g, (Cout,), dtype=jnp.float32)
    beta = 0.1 * jax.random.normal(k_bt, (Cout,), dtype=jnp.float32)

    ref = _reference(x, weight, bias, gamma, beta, dilation=dilation, padding=padding)

    # f32 matmul operands: strict check against the PyTorch-equivalent reference.
    out = conv2d_bn_forward(x, weight, bias, gamma, beta, dilation=dilation, padding=padding)
    out = jax.block_until_ready(out)
    assert out.shape == ref.shape, (out.shape, ref.shape)
    assert jnp.allclose(out, ref, atol=1e-4, rtol=1e-4), float(jnp.max(jnp.abs(out - ref)))

    # bf16 matmul operands (v6e/v7x fast path; f32 accumulate + f32 BN math): looser check,
    # the difference is purely bf16 rounding of the conv operands.
    out_bf16 = conv2d_bn_forward(x, weight, bias, gamma, beta, dilation=dilation,
                                 padding=padding, compute_dtype=jnp.bfloat16)
    out_bf16 = jax.block_until_ready(out_bf16)
    assert jnp.allclose(out_bf16, ref, atol=1e-1, rtol=1e-1), \
        float(jnp.max(jnp.abs(out_bf16 - ref)))

    print("KERNEL_OK")
</pallas_src>

<mosaic_0001>
module attributes {stable_mosaic.version = 11 : i64} {
  func.func @_conv_stats_kernel(%arg0: i32, %arg1: memref<4x256xf32, #tpu.memory_space<vmem>>, %arg2: memref<4x256xf32, #tpu.memory_space<vmem>>, %arg3: memref<8x36xf32, #tpu.memory_space<vmem>>, %arg4: memref<1x256xf32, #tpu.memory_space<vmem>>, %arg5: memref<8x256xf32, #tpu.memory_space<vmem>>, %arg6: memref<1x8x1xf32, #tpu.memory_space<vmem>>, %arg7: memref<1x8x1xf32, #tpu.memory_space<vmem>>) attributes {dimension_semantics = [#tpu.dimension_semantics<parallel>], iteration_bounds = array<i64: 4>, scalar_prefetch = 0 : i64, scratch_operands = 0 : i64, tpu.core_type = #tpu.core_type<tc>, window_params = [{transform_indices = @transform_0, window_bounds = array<i64: 4, 256>}, {transform_indices = @transform_1, window_bounds = array<i64: 4, 256>}, {pipeline_mode = #tpu.pipeline_mode<synchronous>, transform_indices = @transform_2, window_bounds = array<i64: 8, 36>}, {transform_indices = @transform_3, window_bounds = array<i64: 1, 256>}, {transform_indices = @transform_4, window_bounds = array<i64: 8, 256>}, {transform_indices = @transform_5, window_bounds = array<i64: 1, 8, 1>}, {transform_indices = @transform_6, window_bounds = array<i64: 1, 8, 1>}]} {
    %c0 = arith.constant 0 : index
    %c0_0 = arith.constant 0 : index
    %0 = vector.load %arg1[%c0, %c0_0] : memref<4x256xf32, #tpu.memory_space<vmem>>, vector<4x256xf32>
    %c0_1 = arith.constant 0 : index
    %c0_2 = arith.constant 0 : index
    %1 = vector.load %arg2[%c0_1, %c0_2] : memref<4x256xf32, #tpu.memory_space<vmem>>, vector<4x256xf32>
    %2 = tpu.concatenate %0, %1 in 1 : vector<4x256xf32>, vector<4x256xf32> -> vector<4x512xf32>
    %3 = vector.extract_strided_slice %2 {offsets = [0, 0], sizes = [4, 256], strides = [1, 1]} : vector<4x512xf32> to vector<4x256xf32>
    %4 = vector.extract_strided_slice %2 {offsets = [0, 2], sizes = [4, 256], strides = [1, 1]} : vector<4x512xf32> to vector<4x256xf32>
    %5 = vector.extract_strided_slice %2 {offsets = [0, 4], sizes = [4, 256], strides = [1, 1]} : vector<4x512xf32> to vector<4x256xf32>
    %6 = vector.extract_strided_slice %2 {offsets = [0, 40], sizes = [4, 256], strides = [1, 1]} : vector<4x512xf32> to vector<4x256xf32>
    %7 = vector.extract_strided_slice %2 {offsets = [0, 42], sizes = [4, 256], strides = [1, 1]} : vector<4x512xf32> to vector<4x256xf32>
    %8 = vector.extract_strided_slice %2 {offsets = [0, 44], sizes = [4, 256], strides = [1, 1]} : vector<4x512xf32> to vector<4x256xf32>
    %9 = vector.extract_strided_slice %2 {offsets = [0, 80], sizes = [4, 256], strides = [1, 1]} : vector<4x512xf32> to vector<4x256xf32>
    %10 = vector.extract_strided_slice %2 {offsets = [0, 82], sizes = [4, 256], strides = [1, 1]} : vector<4x512xf32> to vector<4x256xf32>
    %11 = vector.extract_strided_slice %2 {offsets = [0, 84], sizes = [4, 256], strides = [1, 1]} : vector<4x512xf32> to vector<4x256xf32>
    %12 = tpu.concatenate %3, %4, %5, %6, %7, %8, %9, %10, %11 in 0 : vector<4x256xf32>, vector<4x256xf32>, vector<4x256xf32>, vector<4x256xf32>, vector<4x256xf32>, vector<4x256xf32>, vector<4x256xf32>, vector<4x256xf32>, vector<4x256xf32> -> vector<36x256xf32>
    %c0_3 = arith.constant 0 : index
    %c0_4 = arith.constant 0 : index
    %13 = vector.load %arg3[%c0_3, %c0_4] : memref<8x36xf32, #tpu.memory_space<vmem>>, vector<8x36xf32>
    %cst = arith.constant dense<0.000000e+00> : vector<8x256xf32>
    %14 = tpu.matmul %13, %12, %cst {dimension_numbers = #tpu.dot_dimension_numbers<[1], [0], [0], [1], [0, 0, 1, 1], [], []>} : vector<8x36xf32>, vector<36x256xf32>, vector<8x256xf32> -> vector<8x256xf32>
    %c0_5 = arith.constant 0 : index
    %c0_6 = arith.constant 0 : index
    %15 = vector.load %arg5[%c0_5, %c0_6] : memref<8x256xf32, #tpu.memory_space<vmem>>, vector<8x256xf32>
    tpu.vector_store %arg5[%c0_5, %c0_6], %14 {strides = array<i32>} : memref<8x256xf32, #tpu.memory_space<vmem>>, vector<8x256xf32>,
    %c0_7 = arith.constant 0 : index
    %c0_8 = arith.constant 0 : index
    %16 = vector.load %arg4[%c0_7, %c0_8] : memref<1x256xf32, #tpu.memory_space<vmem>>, vector<1x256xf32>
    %17 = vector.broadcast %16 : vector<1x256xf32> to vector<8x256xf32>
    %18 = arith.mulf %14, %17 : vector<8x256xf32>
    %cst_9 = arith.constant dense<0.000000e+00> : vector<8xf32>
    %19 = vector.multi_reduction <add>, %18, %cst_9 [1] : vector<8x256xf32> to vector<8xf32>
    %20 = vector.shape_cast %19 : vector<8xf32> to vector<8x1xf32>
    %c0_10 = arith.constant 0 : index
    %c0_11 = arith.constant 0 : index
    %c0_12 = arith.constant 0 : index
    %21 = vector.load %arg6[%c0_10, %c0_11, %c0_12] : memref<1x8x1xf32, #tpu.memory_space<vmem>>, vector<1x8x1xf32>
    %22 = vector.shape_cast %21 : vector<1x8x1xf32> to vector<8x1xf32>
    %23 = vector.shape_cast %20 : vector<8x1xf32> to vector<1x8x1xf32>
    tpu.vector_store %arg6[%c0_10, %c0_11, %c0_12], %23 {strides = array<i32>} : memref<1x8x1xf32, #tpu.memory_space<vmem>>, vector<1x8x1xf32>,
    %24 = arith.mulf %18, %14 : vector<8x256xf32>
    %cst_13 = arith.constant dense<0.000000e+00> : vector<8xf32>
    %25 = vector.multi_reduction <add>, %24, %cst_13 [1] : vector<8x256xf32> to vector<8xf32>
    %26 = vector.shape_cast %25 : vector<8xf32> to vector<8x1xf32>
    %c0_14 = arith.constant 0 : index
    %c0_15 = arith.constant 0 : index
    %c0_16 = arith.constant 0 : index
    %27 = vector.load %arg7[%c0_14, %c0_15, %c0_16] : memref<1x8x1xf32, #tpu.memory_space<vmem>>, vector<1x8x1xf32>
    %28 = vector.shape_cast %27 : vector<1x8x1xf32> to vector<8x1xf32>
    %29 = vector.shape_cast %26 : vector<8x1xf32> to vector<1x8x1xf32>
    tpu.vector_store %arg7[%c0_14, %c0_15, %c0_16], %29 {strides = array<i32>} : memref<1x8x1xf32, #tpu.memory_space<vmem>>, vector<1x8x1xf32>,
    return
  }
  func.func @transform_0(%arg0: i32) -> (i32, i32) {
    %c0_i32 = arith.constant 0 : i32
    %c0_i32_0 = arith.constant 0 : i32
    return %c0_i32, %arg0 : i32, i32
  }
  func.func @transform_1(%arg0: i32) -> (i32, i32) {
    %c1_i32 = arith.constant 1 : i32
    %0 = arith.addi %arg0, %c1_i32 : i32
    %c0_i32 = arith.constant 0 : i32
    %c0_i32_0 = arith.constant 0 : i32
    return %c0_i32, %0 : i32, i32
  }
  func.func @transform_2(%arg0: i32) -> (i32, i32) {
    %c0_i32 = arith.constant 0 : i32
    %c0_i32_0 = arith.constant 0 : i32
    %c0_i32_1 = arith.constant 0 : i32
    return %c0_i32, %c0_i32_0 : i32, i32
  }
  func.func @transform_3(%arg0: i32) -> (i32, i32) {
    %c0_i32 = arith.constant 0 : i32
    %c0_i32_0 = arith.constant 0 : i32
    return %c0_i32, %arg0 : i32, i32
  }
  func.func @transform_4(%arg0: i32) -> (i32, i32) {
    %c0_i32 = arith.constant 0 : i32
    %c0_i32_0 = arith.constant 0 : i32
    return %c0_i32, %arg0 : i32, i32
  }
  func.func @transform_5(%arg0: i32) -> (i32, i32, i32) {
    %c0_i32 = arith.constant 0 : i32
    %c0_i32_0 = arith.constant 0 : i32
    %c0_i32_1 = arith.constant 0 : i32
    return %arg0, %c0_i32, %c0_i32_0 : i32, i32, i32
  }
  func.func @transform_6(%arg0: i32) -> (i32, i32, i32) {
    %c0_i32 = arith.constant 0 : i32
    %c0_i32_0 = arith.constant 0 : i32
    %c0_i32_1 = arith.constant 0 : i32
    return %arg0, %c0_i32, %c0_i32_0 : i32, i32, i32
  }
}

module attributes {stable_mosaic.version = 11 : i64} {
  func.func @_bn_apply_kernel(%arg0: i32, %arg1: memref<8x256xf32, #tpu.memory_space<vmem>>, %arg2: memref<8x1xf32, #tpu.memory_space<vmem>>, %arg3: memref<8x1xf32, #tpu.memory_space<vmem>>, %arg4: memref<8x256xf32, #tpu.memory_space<vmem>>) attributes {dimension_semantics = [#tpu.dimension_semantics<parallel>], iteration_bounds = array<i64: 4>, scalar_prefetch = 0 : i64, scratch_operands = 0 : i64, tpu.core_type = #tpu.core_type<tc>, window_params = [{transform_indices = @transform_0, window_bounds = array<i64: 8, 256>}, {pipeline_mode = #tpu.pipeline_mode<synchronous>, transform_indices = @transform_1, window_bounds = array<i64: 8, 1>}, {pipeline_mode = #tpu.pipeline_mode<synchronous>, transform_indices = @transform_2, window_bounds = array<i64: 8, 1>}, {transform_indices = @transform_3, window_bounds = array<i64: 8, 256>}]} {
    %c0 = arith.constant 0 : index
    %c0_0 = arith.constant 0 : index
    %0 = vector.load %arg1[%c0, %c0_0] : memref<8x256xf32, #tpu.memory_space<vmem>>, vector<8x256xf32>
    %c0_1 = arith.constant 0 : index
    %c0_2 = arith.constant 0 : index
    %1 = vector.load %arg2[%c0_1, %c0_2] : memref<8x1xf32, #tpu.memory_space<vmem>>, vector<8x1xf32>
    %2 = vector.broadcast %1 : vector<8x1xf32> to vector<8x256xf32>
    %3 = arith.mulf %0, %2 : vector<8x256xf32>
    %c0_3 = arith.constant 0 : index
    %c0_4 = arith.constant 0 : index
    %4 = vector.load %arg3[%c0_3, %c0_4] : memref<8x1xf32, #tpu.memory_space<vmem>>, vector<8x1xf32>
    %5 = vector.broadcast %4 : vector<8x1xf32> to vector<8x256xf32>
    %6 = arith.addf %3, %5 : vector<8x256xf32>
    %c0_5 = arith.constant 0 : index
    %c0_6 = arith.constant 0 : index
    %7 = vector.load %arg4[%c0_5, %c0_6] : memref<8x256xf32, #tpu.memory_space<vmem>>, vector<8x256xf32>
    tpu.vector_store %arg4[%c0_5, %c0_6], %6 {strides = array<i32>} : memref<8x256xf32, #tpu.memory_space<vmem>>, vector<8x256xf32>,
    return
  }
  func.func @transform_0(%arg0: i32) -> (i32, i32) {
    %c0_i32 = arith.constant 0 : i32
    %c0_i32_0 = arith.constant 0 : i32
    return %c0_i32, %arg0 : i32, i32
  }
  func.func @transform_1(%arg0: i32) -> (i32, i32) {
    %c0_i32 = arith.constant 0 : i32
    %c0_i32_0 = arith.constant 0 : i32
    %c0_i32_1 = arith.constant 0 : i32
    return %c0_i32, %c0_i32_0 : i32, i32
  }
  func.func @transform_2(%arg0: i32) -> (i32, i32) {
    %c0_i32 = arith.constant 0 : i32
    %c0_i32_0 = arith.constant 0 : i32
    %c0_i32_1 = arith.constant 0 : i32
    return %c0_i32, %c0_i32_0 : i32, i32
  }
  func.func @transform_3(%arg0: i32) -> (i32, i32) {
    %c0_i32 = arith.constant 0 : i32
    %c0_i32_0 = arith.constant 0 : i32
    return %c0_i32, %arg0 : i32, i32
  }
}

</mosaic_0001>

<llo_original>
// kernel: conv2d_bn_forward.3
$region0: #{conv2d_bn_forward.3}
  #allocation0 [shape = 'u32[]', space=smem, size = 0x4, offset = 0x4, fixed_abs, tag = 'smem constant byte address 0x4 - core index']
  #allocation1 [shape = 'u32[72,128]{1,0:T(1,128)}', space=vmem, size = 0x9000, scoped, tag = 'internal scratch']
  %s0 = inlined_call_operand.vmem [shape: f32[8,1024], index: 0, kind: input, shape index: {}]
  %s1 = inlined_call_operand.vmem [shape: f32[8,1], index: 1, kind: input, shape index: {}]
  %s2 = inlined_call_operand.vmem [shape: f32[8,1], index: 2, kind: input, shape index: {}]
  %s3 = inlined_call_operand.vmem [shape: f32[8,1024], index: 3, kind: output, shape index: {}]
  %s4 = sld [smem:[#allocation0]]
  $region45: #{conv2d_bn_forward.3} parent=0
    _
  %s6 = ssub.s32 1, %s4
  %s7 = scalar_select 0, %s6, %s4
  loop: start=0, step=1, limit=6
  $region2: #{conv2d_bn_forward.3} parent=0 // loop_pre_header
    _
  $region3: #{conv2d_bn_forward.3} parent=0 // loop_header
    %s9 = sphi 0, %s13
    %p10 = scmp.ge.s32.totalorder %s9, 6
    %s19 = sphi 0, %s21
    %s22 = sphi 0, %s19
    %s23 = sphi 0, %s22
    %s39 = sphi 0, %s23
    %s43 = sphi 0, %s43
    %s45 = sphi 0, %s43
    %s46 = sphi 0, %s45
    %s60 = sphi 0, %s46
    %s64 = sphi 0, %s64
    %s66 = sphi 0, %s64
    %s67 = sphi 0, %s66
    %s81 = sphi 0, %s67
    %s87 = sphi 0, %s89
    %s90 = sphi 0, %s87
    %s91 = sphi 0, %s90
    %s107 = sphi 0, %s91
  $region4: #{conv2d_bn_forward.3} parent=0 // loop_header_branch
    %12 = sbr.rel (%p10) target = $region8
  $region5: #{conv2d_bn_forward.3} parent=0 // loop_body
    %s14 = ssub.s32 %s9, 1
    %s15 = ssub.s32 %s9, 2
    %s16 = sadd.s32 %s9, 1
    %s17 = ssub.s32 %s9, %s16
    %p18 = scmp.eq.s32.totalorder %s17, 0
    %s20 = sadd.s32 %s19, 1
    %s21 = scalar_select %p18, %s19, %s20
    %p24 = pneg %p18
    %p25 = scmp.eq.s32.totalorder %s9, 3
    %p26 = por %p24, %p25
    %p27 = scmp.ne.s32.totalorder %s19, %s22
    %p28 = scmp.eq.s32.totalorder %s9, 0
    %p29 = por %p27, %p28
    %p30 = scmp.ne.s32.totalorder %s19, %s22
    %p31 = scmp.eq.s32.totalorder %s14, 3
    %p32 = por %p30, %p31
    %p33 = scmp.ne.s32.totalorder %s22, %s23
    %p34 = scmp.eq.s32.totalorder %s14, 0
    %p35 = por %p33, %p34
    %p36 = scmp.ne.s32.totalorder %s22, %s23
    %p37 = scmp.eq.s32.totalorder %s15, 3
    %p38 = por %p36, %p37
    %p40 = scmp.ne.s32.totalorder %s23, %s39
    %p41 = scmp.eq.s32.totalorder %s15, 0
    %p42 = por %p40, %p41
    %s44 = sadd.s32 %s43, 1
    %p47 = scmp.eq.s32.totalorder %s9, 3
    %p48 = scmp.ne.s32.totalorder %s43, %s45
    %p49 = scmp.eq.s32.totalorder %s9, 0
    %p50 = por %p48, %p49
    %p51 = scmp.ne.s32.totalorder %s43, %s45
    %p52 = scmp.eq.s32.totalorder %s14, 3
    %p53 = por %p51, %p52
    %p54 = scmp.ne.s32.totalorder %s45, %s46
    %p55 = scmp.eq.s32.totalorder %s14, 0
    %p56 = por %p54, %p55
    %p57 = scmp.ne.s32.totalorder %s45, %s46
    %p58 = scmp.eq.s32.totalorder %s15, 3
    %p59 = por %p57, %p58
    %p61 = scmp.ne.s32.totalorder %s46, %s60
    %p62 = scmp.eq.s32.totalorder %s15, 0
    %p63 = por %p61, %p62
    %s65 = sadd.s32 %s64, 1
    %p68 = scmp.eq.s32.totalorder %s9, 3
    %p69 = scmp.ne.s32.totalorder %s64, %s66
    %p70 = scmp.eq.s32.totalorder %s9, 0
    %p71 = por %p69, %p70
    %p72 = scmp.ne.s32.totalorder %s64, %s66
    %p73 = scmp.eq.s32.totalorder %s14, 3
    %p74 = por %p72, %p73
    %p75 = scmp.ne.s32.totalorder %s66, %s67
    %p76 = scmp.eq.s32.totalorder %s14, 0
    %p77 = por %p75, %p76
    %p78 = scmp.ne.s32.totalorder %s66, %s67
    %p79 = scmp.eq.s32.totalorder %s15, 3
    %p80 = por %p78, %p79
    %p82 = scmp.ne.s32.totalorder %s67, %s81
    %p83 = scmp.eq.s32.totalorder %s15, 0
    %p84 = por %p82, %p83
    %s85 = ssub.s32 %s9, %s16
    %p86 = scmp.eq.s32.totalorder %s85, 0
    %s88 = sadd.s32 %s87, 1
    %s89 = scalar_select %p86, %s87, %s88
    %p92 = pneg %p86
    %p93 = scmp.eq.s32.totalorder %s9, 3
    %p94 = por %p92, %p93
    %p95 = scmp.ne.s32.totalorder %s87, %s90
    %p96 = scmp.eq.s32.totalorder %s9, 0
    %p97 = por %p95, %p96
    %p98 = scmp.ne.s32.totalorder %s87, %s90
    %p99 = scmp.eq.s32.totalorder %s14, 3
    %p100 = por %p98, %p99
    %p101 = scmp.ne.s32.totalorder %s90, %s91
    %p102 = scmp.eq.s32.totalorder %s14, 0
    %p103 = por %p101, %p102
    %p104 = scmp.ne.s32.totalorder %s90, %s91
    %p105 = scmp.eq.s32.totalorder %s15, 3
    %p106 = por %p104, %p105
    %p108 = scmp.ne.s32.totalorder %s91, %s107
    %p109 = scmp.eq.s32.totalorder %s15, 0
    %p110 = por %p108, %p109
    %p111 = scmp.le.s32.totalorder 1, %s9
    %p112 = scmp.lt.s32.totalorder %s9, 5
    %p113 = pnand %p111, %p112
    %p114 = pneg %p113
    // Predicated region
    $region9: #{conv2d_bn_forward.3} parent=5 // pred_check
      _
    $region10: #{conv2d_bn_forward.3} parent=5 // pred_check_branch
      %116 = sbr.rel (%p113) target = $region12
    $region11: #{conv2d_bn_forward.3} parent=5 // pred_region
      %s117 = ssub.s32 %s9, 1
      // Predicated region
      $region13: #{conv2d_bn_forward.3} parent=11 // pred_check
        %p118 = pneg %p56
      $region14: #{conv2d_bn_forward.3} parent=11 // pred_check_branch
        %120 = sbr.rel (%p118) target = $region16
      $region15: #{conv2d_bn_forward.3} parent=11 // pred_region
        _
      $region16: #{conv2d_bn_forward.3} parent=11 // pred_fallthru
        _
      // Predicated region
      $region17: #{conv2d_bn_forward.3} parent=11 // pred_check
        %p121 = pneg %p77
      $region18: #{conv2d_bn_forward.3} parent=11 // pred_check_branch
        %123 = sbr.rel (%p121) target = $region20
      $region19: #{conv2d_bn_forward.3} parent=11 // pred_region
        _
      $region20: #{conv2d_bn_forward.3} parent=11 // pred_fallthru
        _
    $region12: #{conv2d_bn_forward.3} parent=5 // pred_fallthru
      _
    %p124 = scmp.lt.s32.totalorder %s9, 4
    // Predicated region
    $region21: #{conv2d_bn_forward.3} parent=5 // pred_check
      %p125 = pneg %p124
    $region22: #{conv2d_bn_forward.3} parent=5 // pred_check_branch
      %127 = sbr.rel (%p125) target = $region24
    $region23: #{conv2d_bn_forward.3} parent=5 // pred_region
      // Predicated region
      $region25: #{conv2d_bn_forward.3} parent=23 // pred_check
        %p128 = pneg %p29
      $region26: #{conv2d_bn_forward.3} parent=23 // pred_check_branch
        %130 = sbr.rel (%p128) target = $region28
      $region27: #{conv2d_bn_forward.3} parent=23 // pred_region
        %s131 = smul.u32 2, %s9
        %p132 = scmp.lt.s32.totalorder %s131, 7
        %s133 = scalar_select %p132, %s131, 7
        %s134 = smul.addr %s133, 8
        %s135 = scalar_lea.vmem %s0, %s134
        %s136 = smul.u32 2, %s9
      $region28: #{conv2d_bn_forward.3} parent=23 // pred_fallthru
        _
    $region24: #{conv2d_bn_forward.3} parent=5 // pred_fallthru
      _
    %p137 = scmp.le.s32.totalorder 1, %s9
    %p138 = scmp.lt.s32.totalorder %s9, 5
    %p139 = pnand %p137, %p138
    %p140 = pneg %p139
    // Predicated region
    $region29: #{conv2d_bn_forward.3} parent=5 // pred_check
      _
    $region30: #{conv2d_bn_forward.3} parent=5 // pred_check_branch
      %142 = sbr.rel (%p139) target = $region32
    $region31: #{conv2d_bn_forward.3} parent=5 // pred_region
      %s143 = ssub.s32 %s9, 1
      %s144 = smul.u32 2, %s14
      %p145 = scmp.lt.s32.totalorder %s144, 7
      %s146 = scalar_select %p145, %s144, 7
      %s147 = smul.addr %s146, 8
      %s148 = scalar_lea.vmem %s0, %s147
      %p149 = pneg %p35
      %p150 = pneg %p32
      %p151 = pneg %p56
      %p152 = pneg %p53
      %p153 = pneg %p77
      %p154 = pneg %p74
      %p155 = pneg %p103
      %p156 = pneg %p100
      %s157 = smul.u32 2, %s14
      %p158 = scmp.lt.s32.totalorder %s157, 7
      %s159 = scalar_select %p158, %s157, 7
      %s160 = smul.addr %s159, 8
      %s161 = scalar_lea.vmem %s3, %s160
      %s162 = smul.u32 2, %s14
      %p163 = scmp.lt.s32.totalorder %s162, 7
      %s164 = scalar_select %p163, %s162, 7
      %s165 = smul.addr %s164, 8
      %s166 = scalar_lea.vmem %s0, %s165
      %s167 = smul.u32 2, %s14
      %s168 = smul.u32 2, %s14
      %p169 = scmp.lt.s32.totalorder %s168, 7
      %s170 = scalar_select %p169, %s168, 7
      %s171 = smul.addr %s170, 8
      %s172 = scalar_lea.vmem %s3, %s171
      %s173 = smul.u32 2, %s14
      %v174 = vld [vmem:[%s166] sm:$0xff]
      %v175 = vld [vmem:[%s166 + $0x8] sm:$0xff]
      %v176 = vld [vmem:[%s1] sm:$0xff]
      %178 = vset.pattern.permute.xlu0 0
      %179 = vperm.xlu0 %178, %v176
      %v180 = vpop.permute.xlu0 %179
      %v182 = vmul.f32 %v174, %v180
      %v183 = vmul.f32 %v175, %v180
      %v184 = vld [vmem:[%s2] sm:$0xff]
      %186 = vset.pattern.permute.xlu0 0
      %187 = vperm.xlu0 %186, %v184
      %v188 = vpop.permute.xlu0 %187
      %v190 = vadd.f32 %v182, %v188
      %v191 = vadd.f32 %v183, %v188
      %192 = vst [vmem:[%s172] sm:$0xff] %v190
      %193 = vst [vmem:[%s172 + $0x8] sm:$0xff] %v191
      %s194 = smul.u32 2, %s14
      %p195 = scmp.lt.s32.totalorder %s194, 7
      %s196 = scalar_select %p195, %s194, 7
      %s197 = smul.addr %s196, 8
      %s198 = scalar_lea.vmem %s3, %s197
      // Predicated region
      $region33: #{conv2d_bn_forward.3} parent=31 // pred_check
        %p199 = pneg %p100
      $region34: #{conv2d_bn_forward.3} parent=31 // pred_check_branch
        %201 = sbr.rel (%p199) target = $region36
      $region35: #{conv2d_bn_forward.3} parent=31 // pred_region
        %s202 = smul.u32 2, %s14
      $region36: #{conv2d_bn_forward.3} parent=31 // pred_fallthru
        _
    $region32: #{conv2d_bn_forward.3} parent=5 // pred_fallthru
      _
    %p203 = scmp.le.s32.totalorder 2, %s9
    // Predicated region
    $region37: #{conv2d_bn_forward.3} parent=5 // pred_check
      %p204 = pneg %p203
    $region38: #{conv2d_bn_forward.3} parent=5 // pred_check_branch
      %206 = sbr.rel (%p204) target = $region40
    $region39: #{conv2d_bn_forward.3} parent=5 // pred_region
      %s207 = ssub.s32 %s9, 2
      // Predicated region
      $region41: #{conv2d_bn_forward.3} parent=39 // pred_check
        %p208 = pneg %p106
      $region42: #{conv2d_bn_forward.3} parent=39 // pred_check_branch
        %210 = sbr.rel (%p208) target = $region44
      $region43: #{conv2d_bn_forward.3} parent=39 // pred_region
        %s211 = smul.u32 2, %s15
        %p212 = scmp.lt.s32.totalorder %s211, 7
        %s213 = scalar_select %p212, %s211, 7
        %s214 = smul.addr %s213, 8
        %s215 = scalar_lea.vmem %s3, %s214
      $region44: #{conv2d_bn_forward.3} parent=39 // pred_fallthru
        _
    $region40: #{conv2d_bn_forward.3} parent=5 // pred_fallthru
      _
  $region6: #{conv2d_bn_forward.3} parent=0 // loop_footer
    %s13 = sadd.s32 1, %s9
  $region7: #{conv2d_bn_forward.3} parent=0 // loop_footer_branch
    %8 = sbr.rel target = $region3
  $region8: #{conv2d_bn_forward.3} parent=0 // loop_exit
    _

// kernel: conv2d_bn_forward.2
$region0: #{conv2d_bn_forward.2}
  #allocation0 [shape = 'u32[]', space=smem, size = 0x4, offset = 0x4, fixed_abs, tag = 'smem constant byte address 0x4 - core index']
  #allocation1 [shape = 'u32[72,128]{1,0:T(1,128)}', space=vmem, size = 0x9000, scoped, tag = 'internal scratch']
  %s0 = inlined_call_operand.vmem [shape: f32[4,1280], index: 0, kind: input, shape index: {}, may-alias: {0,1}]
  %s1 = inlined_call_operand.vmem [shape: f32[4,1280], index: 1, kind: input, shape index: {}, may-alias: {0,1}]
  %s2 = inlined_call_operand.vmem [shape: f32[8,36], index: 2, kind: input, shape index: {}]
  %s3 = inlined_call_operand.vmem [shape: f32[1,1024], index: 3, kind: input, shape index: {}]
  %s4 = inlined_call_operand.vmem [shape: f32[8,1024], index: 4, kind: output, shape index: {0}]
  %s5 = inlined_call_operand.vmem [shape: f32[4,8,1], index: 5, kind: output, shape index: {1}]
  %s6 = inlined_call_operand.vmem [shape: f32[4,8,1], index: 6, kind: output, shape index: {2}]
  %7 = xla_tuple %s4, %s5, %s6
  %s8 = sld [smem:[#allocation0]]
  $region65: #{conv2d_bn_forward.2} parent=0
    _
  %s10 = ssub.s32 1, %s8
  %s11 = scalar_select 0, %s10, %s8
  loop: start=0, step=1, limit=6
  $region2: #{conv2d_bn_forward.2} parent=0 // loop_pre_header
    _
  $region3: #{conv2d_bn_forward.2} parent=0 // loop_header
    %s13 = sphi 0, %s17
    %p14 = scmp.ge.s32.totalorder %s13, 6
    %s23 = sphi 0, %s25
    %s26 = sphi 0, %s23
    %s27 = sphi 0, %s26
    %s43 = sphi 0, %s27
    %s51 = sphi 0, %s53
    %s54 = sphi 0, %s51
    %s55 = sphi 0, %s54
    %s71 = sphi 0, %s55
    %s75 = sphi 0, %s75
    %s77 = sphi 0, %s75
    %s78 = sphi 0, %s77
    %s92 = sphi 0, %s78
    %s98 = sphi 0, %s100
    %s101 = sphi 0, %s98
    %s102 = sphi 0, %s101
    %s118 = sphi 0, %s102
    %s124 = sphi 0, %s126
    %s127 = sphi 0, %s124
    %s128 = sphi 0, %s127
    %s144 = sphi 0, %s128
    %s150 = sphi 0, %s152
    %s153 = sphi 0, %s150
    %s154 = sphi 0, %s153
    %s170 = sphi 0, %s154
    %s176 = sphi 0, %s178
    %s179 = sphi 0, %s176
    %s180 = sphi 0, %s179
    %s196 = sphi 0, %s180
  $region4: #{conv2d_bn_forward.2} parent=0 // loop_header_branch
    %16 = sbr.rel (%p14) target = $region8
  $region5: #{conv2d_bn_forward.2} parent=0 // loop_body
    %s18 = ssub.s32 %s13, 1
    %s19 = ssub.s32 %s13, 2
    %s20 = sadd.s32 %s13, 1
    %s21 = ssub.s32 %s13, %s20
    %p22 = scmp.eq.s32.totalorder %s21, 0
    %s24 = sadd.s32 %s23, 1
    %s25 = scalar_select %p22, %s23, %s24
    %p28 = pneg %p22
    %p29 = scmp.eq.s32.totalorder %s13, 3
    %p30 = por %p28, %p29
    %p31 = scmp.ne.s32.totalorder %s23, %s26
    %p32 = scmp.eq.s32.totalorder %s13, 0
    %p33 = por %p31, %p32
    %p34 = scmp.ne.s32.totalorder %s23, %s26
    %p35 = scmp.eq.s32.totalorder %s18, 3
    %p36 = por %p34, %p35
    %p37 = scmp.ne.s32.totalorder %s26, %s27
    %p38 = scmp.eq.s32.totalorder %s18, 0
    %p39 = por %p37, %p38
    %p40 = scmp.ne.s32.totalorder %s26, %s27
    %p41 = scmp.eq.s32.totalorder %s19, 3
    %p42 = por %p40, %p41
    %p44 = scmp.ne.s32.totalorder %s27, %s43
    %p45 = scmp.eq.s32.totalorder %s19, 0
    %p46 = por %p44, %p45
    %s47 = sadd.s32 %s13, 1
    %s48 = sadd.s32 %s20, 1
    %s49 = ssub.s32 %s47, %s48
    %p50 = scmp.eq.s32.totalorder %s49, 0
    %s52 = sadd.s32 %s51, 1
    %s53 = scalar_select %p50, %s51, %s52
    %p56 = pneg %p50
    %p57 = scmp.eq.s32.totalorder %s13, 3
    %p58 = por %p56, %p57
    %p59 = scmp.ne.s32.totalorder %s51, %s54
    %p60 = scmp.eq.s32.totalorder %s13, 0
    %p61 = por %p59, %p60
    %p62 = scmp.ne.s32.totalorder %s51, %s54
    %p63 = scmp.eq.s32.totalorder %s18, 3
    %p64 = por %p62, %p63
    %p65 = scmp.ne.s32.totalorder %s54, %s55
    %p66 = scmp.eq.s32.totalorder %s18, 0
    %p67 = por %p65, %p66
    %p68 = scmp.ne.s32.totalorder %s54, %s55
    %p69 = scmp.eq.s32.totalorder %s19, 3
    %p70 = por %p68, %p69
    %p72 = scmp.ne.s32.totalorder %s55, %s71
    %p73 = scmp.eq.s32.totalorder %s19, 0
    %p74 = por %p72, %p73
    %s76 = sadd.s32 %s75, 1
    %p79 = scmp.eq.s32.totalorder %s13, 3
    %p80 = scmp.ne.s32.totalorder %s75, %s77
    %p81 = scmp.eq.s32.totalorder %s13, 0
    %p82 = por %p80, %p81
    %p83 = scmp.ne.s32.totalorder %s75, %s77
    %p84 = scmp.eq.s32.totalorder %s18, 3
    %p85 = por %p83, %p84
    %p86 = scmp.ne.s32.totalorder %s77, %s78
    %p87 = scmp.eq.s32.totalorder %s18, 0
    %p88 = por %p86, %p87
    %p89 = scmp.ne.s32.totalorder %s77, %s78
    %p90 = scmp.eq.s32.totalorder %s19, 3
    %p91 = por %p89, %p90
    %p93 = scmp.ne.s32.totalorder %s78, %s92
    %p94 = scmp.eq.s32.totalorder %s19, 0
    %p95 = por %p93, %p94
    %s96 = ssub.s32 %s13, %s20
    %p97 = scmp.eq.s32.totalorder %s96, 0
    %s99 = sadd.s32 %s98, 1
    %s100 = scalar_select %p97, %s98, %s99
    %p103 = pneg %p97
    %p104 = scmp.eq.s32.totalorder %s13, 3
    %p105 = por %p103, %p104
    %p106 = scmp.ne.s32.totalorder %s98, %s101
    %p107 = scmp.eq.s32.totalorder %s13, 0
    %p108 = por %p106, %p107
    %p109 = scmp.ne.s32.totalorder %s98, %s101
    %p110 = scmp.eq.s32.totalorder %s18, 3
    %p111 = por %p109, %p110
    %p112 = scmp.ne.s32.totalorder %s101, %s102
    %p113 = scmp.eq.s32.totalorder %s18, 0
    %p114 = por %p112, %p113
    %p115 = scmp.ne.s32.totalorder %s101, %s102
    %p116 = scmp.eq.s32.totalorder %s19, 3
    %p117 = por %p115, %p116
    %p119 = scmp.ne.s32.totalorder %s102, %s118
    %p120 = scmp.eq.s32.totalorder %s19, 0
    %p121 = por %p119, %p120
    %s122 = ssub.s32 %s13, %s20
    %p123 = scmp.eq.s32.totalorder %s122, 0
    %s125 = sadd.s32 %s124, 1
    %s126 = scalar_select %p123, %s124, %s125
    %p129 = pneg %p123
    %p130 = scmp.eq.s32.totalorder %s13, 3
    %p131 = por %p129, %p130
    %p132 = scmp.ne.s32.totalorder %s124, %s127
    %p133 = scmp.eq.s32.totalorder %s13, 0
    %p134 = por %p132, %p133
    %p135 = scmp.ne.s32.totalorder %s124, %s127
    %p136 = scmp.eq.s32.totalorder %s18, 3
    %p137 = por %p135, %p136
    %p138 = scmp.ne.s32.totalorder %s127, %s128
    %p139 = scmp.eq.s32.totalorder %s18, 0
    %p140 = por %p138, %p139
    %p141 = scmp.ne.s32.totalorder %s127, %s128
    %p142 = scmp.eq.s32.totalorder %s19, 3
    %p143 = por %p141, %p142
    %p145 = scmp.ne.s32.totalorder %s128, %s144
    %p146 = scmp.eq.s32.totalorder %s19, 0
    %p147 = por %p145, %p146
    %s148 = ssub.s32 %s13, %s20
    %p149 = scmp.eq.s32.totalorder %s148, 0
    %s151 = sadd.s32 %s150, 1
    %s152 = scalar_select %p149, %s150, %s151
    %p155 = pneg %p149
    %p156 = scmp.eq.s32.totalorder %s13, 3
    %p157 = por %p155, %p156
    %p158 = scmp.ne.s32.totalorder %s150, %s153
    %p159 = scmp.eq.s32.totalorder %s13, 0
    %p160 = por %p158, %p159
    %p161 = scmp.ne.s32.totalorder %s150, %s153
    %p162 = scmp.eq.s32.totalorder %s18, 3
    %p163 = por %p161, %p162
    %p164 = scmp.ne.s32.totalorder %s153, %s154
    %p165 = scmp.eq.s32.totalorder %s18, 0
    %p166 = por %p164, %p165
    %p167 = scmp.ne.s32.totalorder %s153, %s154
    %p168 = scmp.eq.s32.totalorder %s19, 3
    %p169 = por %p167, %p168
    %p171 = scmp.ne.s32.totalorder %s154, %s170
    %p172 = scmp.eq.s32.totalorder %s19, 0
    %p173 = por %p171, %p172
    %s174 = ssub.s32 %s13, %s20
    %p175 = scmp.eq.s32.totalorder %s174, 0
    %s177 = sadd.s32 %s176, 1
    %s178 = scalar_select %p175, %s176, %s177
    %p181 = pneg %p175
    %p182 = scmp.eq.s32.totalorder %s13, 3
    %p183 = por %p181, %p182
    %p184 = scmp.ne.s32.totalorder %s176, %s179
    %p185 = scmp.eq.s32.totalorder %s13, 0
    %p186 = por %p184, %p185
    %p187 = scmp.ne.s32.totalorder %s176, %s179
    %p188 = scmp.eq.s32.totalorder %s18, 3
    %p189 = por %p187, %p188
    %p190 = scmp.ne.s32.totalorder %s179, %s180
    %p191 = scmp.eq.s32.totalorder %s18, 0
    %p192 = por %p190, %p191
    %p193 = scmp.ne.s32.totalorder %s179, %s180
    %p194 = scmp.eq.s32.totalorder %s19, 3
    %p195 = por %p193, %p194
    %p197 = scmp.ne.s32.totalorder %s180, %s196
    %p198 = scmp.eq.s32.totalorder %s19, 0
    %p199 = por %p197, %p198
    %p200 = scmp.le.s32.totalorder 1, %s13
    %p201 = scmp.lt.s32.totalorder %s13, 5
    %p202 = pnand %p200, %p201
    %p203 = pneg %p202
    // Predicated region
    $region9: #{conv2d_bn_forward.2} parent=5 // pred_check
      _
    $region10: #{conv2d_bn_forward.2} parent=5 // pred_check_branch
      %205 = sbr.rel (%p202) target = $region12
    $region11: #{conv2d_bn_forward.2} parent=5 // pred_region
      %s206 = ssub.s32 %s13, 1
      // Predicated region
      $region13: #{conv2d_bn_forward.2} parent=11 // pred_check
        %p207 = pneg %p88
      $region14: #{conv2d_bn_forward.2} parent=11 // pred_check_branch
        %209 = sbr.rel (%p207) target = $region16
      $region15: #{conv2d_bn_forward.2} parent=11 // pred_region
        _
      $region16: #{conv2d_bn_forward.2} parent=11 // pred_fallthru
        _
    $region12: #{conv2d_bn_forward.2} parent=5 // pred_fallthru
      _
    %p210 = scmp.lt.s32.totalorder %s13, 4
    // Predicated region
    $region17: #{conv2d_bn_forward.2} parent=5 // pred_check
      %p211 = pneg %p210
    $region18: #{conv2d_bn_forward.2} parent=5 // pred_check_branch
      %213 = sbr.rel (%p211) target = $region20
    $region19: #{conv2d_bn_forward.2} parent=5 // pred_region
      // Predicated region
      $region21: #{conv2d_bn_forward.2} parent=19 // pred_check
        %p214 = pneg %p33
      $region22: #{conv2d_bn_forward.2} parent=19 // pred_check_branch
        %216 = sbr.rel (%p214) target = $region24
      $region23: #{conv2d_bn_forward.2} parent=19 // pred_region
        %s217 = smul.u32 2, %s13
        %p218 = scmp.lt.s32.totalorder %s217, 9
        %s219 = scalar_select %p218, %s217, 9
        %s220 = smul.addr %s219, 4
        %s221 = scalar_lea.vmem %s0, %s220
        %s222 = smul.u32 2, %s13
      $region24: #{conv2d_bn_forward.2} parent=19 // pred_fallthru
        _
      // Predicated region
      $region25: #{conv2d_bn_forward.2} parent=19 // pred_check
        %p223 = pneg %p61
      $region26: #{conv2d_bn_forward.2} parent=19 // pred_check_branch
        %225 = sbr.rel (%p223) target = $region28
      $region27: #{conv2d_bn_forward.2} parent=19 // pred_region
        %s226 = sadd.s32 %s13, 1
        %s227 = smul.u32 2, %s226
        %p228 = scmp.lt.s32.totalorder %s227, 9
        %s229 = scalar_select %p228, %s227, 9
        %s230 = smul.addr %s229, 4
        %s231 = scalar_lea.vmem %s1, %s230
        %s232 = sadd.s32 %s13, 1
        %s233 = smul.u32 2, %s232
      $region28: #{conv2d_bn_forward.2} parent=19 // pred_fallthru
        _
      // Predicated region
      $region29: #{conv2d_bn_forward.2} parent=19 // pred_check
        %p234 = pneg %p108
      $region30: #{conv2d_bn_forward.2} parent=19 // pred_check_branch
        %236 = sbr.rel (%p234) target = $region32
      $region31: #{conv2d_bn_forward.2} parent=19 // pred_region
        %s237 = smul.u32 2, %s13
        %p238 = scmp.lt.s32.totalorder %s237, 7
        %s239 = scalar_select %p238, %s237, 7
        %s240 = scalar_lea.vmem %s3, %s239
        %s241 = smul.u32 2, %s13
      $region32: #{conv2d_bn_forward.2} parent=19 // pred_fallthru
        _
    $region20: #{conv2d_bn_forward.2} parent=5 // pred_fallthru
      _
    %p242 = scmp.le.s32.totalorder 1, %s13
    %p243 = scmp.lt.s32.totalorder %s13, 5
    %p244 = pnand %p242, %p243
    %p245 = pneg %p244
    // Predicated region
    $region33: #{conv2d_bn_forward.2} parent=5 // pred_check
      _
    $region34: #{conv2d_bn_forward.2} parent=5 // pred_check_branch
      %247 = sbr.rel (%p244) target = $region36
    $region35: #{conv2d_bn_forward.2} parent=5 // pred_region
      %s248 = ssub.s32 %s13, 1
      %s249 = smul.u32 2, %s18
      %p250 = scmp.lt.s32.totalorder %s249, 9
      %s251 = scalar_select %p250, %s249, 9
      %s252 = smul.addr %s251, 4
      %s253 = scalar_lea.vmem %s0, %s252
      %p254 = pneg %p39
      %p255 = pneg %p36
      %s256 = sadd.s32 %s18, 1
      %s257 = smul.u32 2, %s256
      %p258 = scmp.lt.s32.totalorder %s257, 9
      %s259 = scalar_select %p258, %s257, 9
      %s260 = smul.addr %s259, 4
      %s261 = scalar_lea.vmem %s1, %s260
      %p262 = pneg %p67
      %p263 = pneg %p64
      %p264 = pneg %p88
      %p265 = pneg %p85
      %s266 = smul.u32 2, %s18
      %p267 = scmp.lt.s32.totalorder %s266, 7
      %s268 = scalar_select %p267, %s266, 7
      %s269 = scalar_lea.vmem %s3, %s268
      %p270 = pneg %p114
      %p271 = pneg %p111
      %p272 = pneg %p140
      %p273 = pneg %p137
      %s274 = smul.u32 2, %s18
      %p275 = scmp.lt.s32.totalorder %s274, 7
      %s276 = scalar_select %p275, %s274, 7
      %s277 = smul.addr %s276, 8
      %s278 = scalar_lea.vmem %s4, %s277
      %p279 = pneg %p166
      %p280 = pneg %p163
      %p281 = scmp.lt.s32.totalorder %s18, 3
      %s282 = scalar_select %p281, %s18, 3
      %s283 = smul.addr %s282, 8
      %s284 = scalar_lea.vmem %s5, %s283
      %p285 = pneg %p192
      %p286 = pneg %p189
      %p287 = scmp.lt.s32.totalorder %s18, 3
      %s288 = scalar_select %p287, %s18, 3
      %s289 = smul.addr %s288, 8
      %s290 = scalar_lea.vmem %s6, %s289
      %s291 = smul.u32 2, %s18
      %p292 = scmp.lt.s32.totalorder %s291, 9
      %s293 = scalar_select %p292, %s291, 9
      %s294 = smul.addr %s293, 4
      %s295 = scalar_lea.vmem %s0, %s294
      %s296 = smul.u32 2, %s18
      %s297 = sadd.s32 %s18, 1
      %s298 = smul.u32 2, %s297
      %p299 = scmp.lt.s32.totalorder %s298, 9
      %s300 = scalar_select %p299, %s298, 9
      %s301 = smul.addr %s300, 4
      %s302 = scalar_lea.vmem %s1, %s301
      %s303 = sadd.s32 %s18, 1
      %s304 = smul.u32 2, %s303
      %s305 = smul.u32 2, %s18
      %p306 = scmp.lt.s32.totalorder %s305, 7
      %s307 = scalar_select %p306, %s305, 7
      %s308 = scalar_lea.vmem %s3, %s307
      %s309 = smul.u32 2, %s18
      %s310 = smul.u32 2, %s18
      %p311 = scmp.lt.s32.totalorder %s310, 7
      %s312 = scalar_select %p311, %s310, 7
      %s313 = smul.addr %s312, 8
      %s314 = scalar_lea.vmem %s4, %s313
      %s315 = smul.u32 2, %s18
      %p316 = scmp.lt.s32.totalorder %s18, 3
      %s317 = scalar_select %p316, %s18, 3
      %s318 = smul.addr %s317, 8
      %s319 = scalar_lea.vmem %s5, %s318
      %p320 = scmp.lt.s32.totalorder %s18, 3
      %s321 = scalar_select %p320, %s18, 3
      %s322 = smul.addr %s321, 8
      %s323 = scalar_lea.vmem %s6, %s322
      %v324 = vld [vmem:[%s295] sm:$0xff]
      %v325 = vld [vmem:[%s302] sm:$0xff]
      %327 = vst [vmem:[#allocation1] ss:$2 sm:$0xff] %v324
      %v328 = vld.sshfl [vmem:[#allocation1] sm:$0xff pattern:$0x75316420]
      %v329 = vld.sshfl [vmem:[#allocation1 + $0x8] sm:$0xff pattern:$0x75316420]
      %333 = vst [vmem:[#allocation1] ss:$2 sm:$0xff] %v325
      %v334 = vld.sshfl [vmem:[#allocation1] sm:$0xff pattern:$0x75316420]
      %v335 = vrot.slane %v328, 4
      %v336 = vrot.slane %v329, 4
      %v337 = vrot.slane %v334, 4
      %338 = vrot.lane.b32.xlu0 %v335, 126
      %v339 = vpop.permute.xlu0 %338
      %340 = vrot.lane.b32.xlu0 %v336, 126
      %v341 = vpop.permute.xlu0 %340
      %342 = vrot.lane.b32.xlu0 %v337, 126
      %v343 = vpop.permute.xlu0 %342
      %vm344 = vcmask 1031168
      %v345 = vsel %vm344, %v339, %v341
      %v346 = vsel %vm344, %v341, %v343
      %349 = vrot.lane.b32.xlu0 %v328, 124
      %v350 = vpop.permute.xlu0 %349
      %351 = vrot.lane.b32.xlu0 %v329, 124
      %v352 = vpop.permute.xlu0 %351
      %353 = vrot.lane.b32.xlu0 %v334, 124
      %v354 = vpop.permute.xlu0 %353
      %vm355 = vcmask 1014784
      %v356 = vsel %vm355, %v350, %v352
      %v357 = vsel %vm355, %v352, %v354
      %360 = vrot.lane.b32.xlu0 %v335, 88
      %v361 = vpop.permute.xlu0 %360
      %362 = vrot.lane.b32.xlu0 %v336, 88
      %v363 = vpop.permute.xlu0 %362
      %364 = vrot.lane.b32.xlu0 %v337, 88
      %v365 = vpop.permute.xlu0 %364
      %vm366 = vcmask 719872
      %v367 = vsel %vm366, %v361, %v363
      %v368 = vsel %vm366, %v363, %v365
      %371 = vrot.lane.b32.xlu0 %v328, 86
      %v372 = vpop.permute.xlu0 %371
      %373 = vrot.lane.b32.xlu0 %v329, 86
      %v374 = vpop.permute.xlu0 %373
      %375 = vrot.lane.b32.xlu0 %v334, 86
      %v376 = vpop.permute.xlu0 %375
      %vm377 = vcmask 703488
      %v378 = vsel %vm377, %v372, %v374
      %v379 = vsel %vm377, %v374, %v376
      %382 = vrot.lane.b32.xlu0 %v335, 84
      %v383 = vpop.permute.xlu0 %382
      %384 = vrot.lane.b32.xlu0 %v336, 84
      %v385 = vpop.permute.xlu0 %384
      %386 = vrot.lane.b32.xlu0 %v337, 84
      %v387 = vpop.permute.xlu0 %386
      %vm388 = vcmask 687104
      %v389 = vsel %vm388, %v383, %v385
      %v390 = vsel %vm388, %v385, %v387
      %393 = vrot.lane.b32.xlu0 %v328, 48
      %v394 = vpop.permute.xlu0 %393
      %395 = vrot.lane.b32.xlu0 %v329, 48
      %v396 = vpop.permute.xlu0 %395
      %397 = vrot.lane.b32.xlu0 %v334, 48
      %v398 = vpop.permute.xlu0 %397
      %vm399 = vcmask 392192
      %v400 = vsel %vm399, %v394, %v396
      %v401 = vsel %vm399, %v396, %v398
      %404 = vrot.lane.b32.xlu0 %v335, 46
      %v405 = vpop.permute.xlu0 %404
      %406 = vrot.lane.b32.xlu0 %v336, 46
      %v407 = vpop.permute.xlu0 %406
      %408 = vrot.lane.b32.xlu0 %v337, 46
      %v409 = vpop.permute.xlu0 %408
      %vm410 = vcmask 375808
      %v411 = vsel %vm410, %v405, %v407
      %v412 = vsel %vm410, %v407, %v409
      %415 = vrot.lane.b32.xlu0 %v328, 44
      %v416 = vpop.permute.xlu0 %415
      %417 = vrot.lane.b32.xlu0 %v329, 44
      %v418 = vpop.permute.xlu0 %417
      %419 = vrot.lane.b32.xlu0 %v334, 44
      %v420 = vpop.permute.xlu0 %419
      %vm421 = vcmask 359424
      %v422 = vsel %vm421, %v416, %v418
      %v423 = vsel %vm421, %v418, %v420
      %vm424 = vcmask 1043456
      %v425 = vsel %vm424, %v328, %v345
      %v426 = vsel %vm424, %v329, %v346
      %v427 = vsel %vm424, %v356, %v367
      %v428 = vsel %vm424, %v357, %v368
      %v429 = vsel %vm424, %v378, %v389
      %v430 = vsel %vm424, %v379, %v390
      %v431 = vsel %vm424, %v400, %v411
      %v432 = vsel %vm424, %v401, %v412
      %v433 = vld [vmem:[%s2] sm:$0xff]
      %vm434 = vcmask 293888
      %v436 = vsel %vm434, %v433, 0
      %v438 = vsel %vm424, %v422, 0
      %v440 = vsel %vm424, %v423, 0
      %442 = vmatpush.msra.mxu0 0.0
      %443 = vmatpush.msra.mxu0 0.0
      %444 = vmatpush.msra.mxu0 0.0
      %445 = vmatpush.msra.mxu0 0.0
      %446 = vmatpush.msra.mxu0 0.0
      %447 = vmatpush.msra.mxu0 0.0
      %448 = vmatpush.msra.mxu0 0.0
      %449 = vmatpush.msra.mxu0 0.0
      %450 = vmatpush.msra.mxu0 0.0
      %451 = vmatpush.msra.mxu0 0.0
      %452 = vmatpush.msra.mxu0 0.0
      %453 = vmatpush.msra.mxu0 %v438
      %454 = vmatpush.msra.mxu0 %v431
      %455 = vmatpush.msra.mxu0 %v429
      %456 = vmatpush.msra.mxu0 %v427
      %457 = vmatpush.msra.mxu0 %v425
      %458 = vmatmul.f32.gmra.mxu0 %v436
      %v459 = vpop.f32.mrf.mxu0
      %v460 = vadd.f32 0.0, %v459
      %461 = vdwg.mxu0
      %462 = vmatpush.msra.mxu0 0.0
      %463 = vmatpush.msra.mxu0 0.0
      %464 = vmatpush.msra.mxu0 0.0
      %465 = vmatpush.msra.mxu0 0.0
      %466 = vmatpush.msra.mxu0 0.0
      %467 = vmatpush.msra.mxu0 0.0
      %468 = vmatpush.msra.mxu0 0.0
      %469 = vmatpush.msra.mxu0 0.0
      %470 = vmatpush.msra.mxu0 0.0
      %471 = vmatpush.msra.mxu0 0.0
      %472 = vmatpush.msra.mxu0 0.0
      %473 = vmatpush.msra.mxu0 %v440
      %474 = vmatpush.msra.mxu0 %v432
      %475 = vmatpush.msra.mxu0 %v430
      %476 = vmatpush.msra.mxu0 %v428
      %477 = vmatpush.msra.mxu0 %v426
      %478 = vmatmul.f32.gmra.mxu0 %v436
      %v479 = vpop.f32.mrf.mxu0
      %v480 = vadd.f32 0.0, %v479
      %481 = vdwg.mxu0
      %482 = vst [vmem:[%s314] sm:$0xff] %v460
      %483 = vst [vmem:[%s314 + $0x8] sm:$0xff] %v480
      %v484 = vld [vmem:[%s308] sm:$0x3]
      %v486 = vperm.slane %v484, 0
      %v487 = vperm.slane %v484, 1
      %v490 = vmul.f32 %v460, %v486
      %v491 = vmul.f32 %v480, %v487
      %v492 = vadd.f32 %v490, %v491
      %493 = vadd.xlane.f32.xlu0 %v492
      %v494 = vpop.xlane.xlu0 %493
      %vm495 = vcmask 7168
      %496 = vst.msk [vmem:[%s319] sm:$0xff] %vm495, %v494
      %v497 = vmul.f32 %v490, %v460
      %v498 = vmul.f32 %v491, %v480
      %v499 = vadd.f32 %v497, %v498
      %500 = vadd.xlane.f32.xlu0 %v499
      %v501 = vpop.xlane.xlu0 %500
      %502 = vst.msk [vmem:[%s323] sm:$0xff] %vm495, %v501
      %s503 = smul.u32 2, %s18
      %p504 = scmp.lt.s32.totalorder %s503, 7
      %s505 = scalar_select %p504, %s503, 7
      %s506 = smul.addr %s505, 8
      %s507 = scalar_lea.vmem %s4, %s506
      %p508 = scmp.lt.s32.totalorder %s18, 3
      %s509 = scalar_select %p508, %s18, 3
      %s510 = smul.addr %s509, 8
      %s511 = scalar_lea.vmem %s5, %s510
      %p512 = scmp.lt.s32.totalorder %s18, 3
      %s513 = scalar_select %p512, %s18, 3
      %s514 = smul.addr %s513, 8
      %s515 = scalar_lea.vmem %s6, %s514
      // Predicated region
      $region37: #{conv2d_bn_forward.2} parent=35 // pred_check
        %p516 = pneg %p137
      $region38: #{conv2d_bn_forward.2} parent=35 // pred_check_branch
        %518 = sbr.rel (%p516) target = $region40
      $region39: #{conv2d_bn_forward.2} parent=35 // pred_region
        %s519 = smul.u32 2, %s18
      $region40: #{conv2d_bn_forward.2} parent=35 // pred_fallthru
        _
      // Predicated region
      $region41: #{conv2d_bn_forward.2} parent=35 // pred_check
        %p520 = pneg %p163
      $region42: #{conv2d_bn_forward.2} parent=35 // pred_check_branch
        %522 = sbr.rel (%p520) target = $region44
      $region43: #{conv2d_bn_forward.2} parent=35 // pred_region
        _
      $region44: #{conv2d_bn_forward.2} parent=35 // pred_fallthru
        _
      // Predicated region
      $region45: #{conv2d_bn_forward.2} parent=35 // pred_check
        %p523 = pneg %p189
      $region46: #{conv2d_bn_forward.2} parent=35 // pred_check_branch
        %525 = sbr.rel (%p523) target = $region48
      $region47: #{conv2d_bn_forward.2} parent=35 // pred_region
        _
      $region48: #{conv2d_bn_forward.2} parent=35 // pred_fallthru
        _
    $region36: #{conv2d_bn_forward.2} parent=5 // pred_fallthru
      _
    %p526 = scmp.le.s32.totalorder 2, %s13
    // Predicated region
    $region49: #{conv2d_bn_forward.2} parent=5 // pred_check
      %p527 = pneg %p526
    $region50: #{conv2d_bn_forward.2} parent=5 // pred_check_branch
      %529 = sbr.rel (%p527) target = $region52
    $region51: #{conv2d_bn_forward.2} parent=5 // pred_region
      %s530 = ssub.s32 %s13, 2
      // Predicated region
      $region53: #{conv2d_bn_forward.2} parent=51 // pred_check
        %p531 = pneg %p143
      $region54: #{conv2d_bn_forward.2} parent=51 // pred_check_branch
        %533 = sbr.rel (%p531) target = $region56
      $region55: #{conv2d_bn_forward.2} parent=51 // pred_region
        %s534 = smul.u32 2, %s19
        %p535 = scmp.lt.s32.totalorder %s534, 7
        %s536 = scalar_select %p535, %s534, 7
        %s537 = smul.addr %s536, 8
        %s538 = scalar_lea.vmem %s4, %s537
      $region56: #{conv2d_bn_forward.2} parent=51 // pred_fallthru
        _
      // Predicated region
      $region57: #{conv2d_bn_forward.2} parent=51 // pred_check
        %p539 = pneg %p169
      $region58: #{conv2d_bn_forward.2} parent=51 // pred_check_branch
        %541 = sbr.rel (%p539) target = $region60
      $region59: #{conv2d_bn_forward.2} parent=51 // pred_region
        %p542 = scmp.lt.s32.totalorder %s19, 3
        %s543 = scalar_select %p542, %s19, 3
        %s544 = smul.addr %s543, 8
        %s545 = scalar_lea.vmem %s5, %s544
      $region60: #{conv2d_bn_forward.2} parent=51 // pred_fallthru
        _
      // Predicated region
      $region61: #{conv2d_bn_forward.2} parent=51 // pred_check
        %p546 = pneg %p195
      $region62: #{conv2d_bn_forward.2} parent=51 // pred_check_branch
        %548 = sbr.rel (%p546) target = $region64
      $region63: #{conv2d_bn_forward.2} parent=51 // pred_region
        %p549 = scmp.lt.s32.totalorder %s19, 3
        %s550 = scalar_select %p549, %s19, 3
        %s551 = smul.addr %s550, 8
        %s552 = scalar_lea.vmem %s6, %s551
      $region64: #{conv2d_bn_forward.2} parent=51 // pred_fallthru
        _
    $region52: #{conv2d_bn_forward.2} parent=5 // pred_fallthru
      _
  $region6: #{conv2d_bn_forward.2} parent=0 // loop_footer
    %s17 = sadd.s32 1, %s13
  $region7: #{conv2d_bn_forward.2} parent=0 // loop_footer_branch
    %12 = sbr.rel target = $region3
  $region8: #{conv2d_bn_forward.2} parent=0 // loop_exit
    _

</llo_original>
